<compile_context>
chip_gen: v6e
topology: v6e:2x2x1
jax: 0.10.0
libtpu: 0.0.40
codegen_flags: <defaults>
</compile_context>

<pallas_src>
import jax
import jax.numpy as jnp
import numpy as np
from jax.experimental import pallas as pl
from jax.experimental.pallas import tpu as pltpu

# ---------------- configuration (mirrors the PyTorch __init__) ----------------
C_IN, C_HID, C_OUT = 4, 32, 8
HP, WP = 1, 7                         # ref = (hp, wp)
PAD_W = (WP - 1) // 2 - 1             # int((wp-1)/2) - 1 = 2
KH, KW = HP, WP                       # axis == 'horizontal' -> kernel (1, 7)
N, H, W = 2, 16, 16                   # input spatial size (NCHW)
HW = H * W                            # 256
TOTAL = N * HW                        # 512 -> lane axis inside the kernel
W_OUT = W + 2 * PAD_W - KW + 1        # 14 (H_out == H since kh=1, pad_h=0)
K_IM2COL = 32                         # 7 taps * 4 ch + 1 bias row + 3 zero rows
BIAS_ROW = KW * C_IN                  # 28: the ones-row that carries conv1 bias


# ------------------------------- Pallas kernel --------------------------------
def conv_pppad_kernel(x_ref, w1_ref, w2_ref, b2_ref, w3_ref, b3_ref,
                      o_ref, xcol_ref):
    # x_ref:  (N, C_IN, HW)    spatial (h*W + w) in lanes, channels in sublanes
    # w1_ref: (C_HID, 32)      im2col-packed conv1 weights, b1 folded into col 28
    # w2_ref: (C_HID, C_HID)   b2_ref: (C_HID, 1)
    # w3_ref: (C_OUT, C_HID)   b3_ref: (C_OUT, 1)
    # o_ref:  (N, C_OUT, HW)   lane-dense output (cols w>=W_OUT cropped by wrapper)
    # xcol_ref: (32, 512) f32  VMEM scratch holding the im2col operand

    # Fold the batch into lanes once: lane p = n*HW + h*W + w  -> (C_IN, 512).
    x_all = jnp.concatenate([x_ref[0], x_ref[1]], axis=1)

    # lane index -> w coordinate (p mod W); shared by every tap (masks hoisted).
    w_idx = jax.lax.broadcasted_iota(jnp.int32, (C_IN, TOTAL), 1) % W

    # --- build the im2col operand: 7 shifted+masked taps, packed 4 rows apart ---
    for k in range(KW):                           # static unroll, 7 taps
        s = k - PAD_W                             # shift along w, in [-2, 4]
        if s == 0:
            tap = x_all
        else:
            # tap[c, p] = x[c, n, h, w+s] where 0 <= w+s < W, else 0.
            # The lane roll wraps across h rows / batches, but exactly those
            # lanes are killed by the mask, so no contamination.
            rolled = pltpu.roll(x_all, shift=(-s) % TOTAL, axis=1)
            if s > 0:
                valid = w_idx < (W - s)
            else:
                valid = w_idx >= (-s)
            tap = jnp.where(valid, rolled, 0.0)
        xcol_ref[4 * k:4 * k + C_IN, :] = tap     # row = tap*4 + channel

    # bias ride-along: row 28 = 1.0 (multiplies b1 packed in w1 col 28),
    # rows 29-31 stay zero (w1 cols 29-31 are zero too).
    ridx = jax.lax.broadcasted_iota(jnp.int32, (C_IN, TOTAL), 0)
    xcol_ref[BIAS_ROW:K_IM2COL, :] = jnp.where(ridx == 0, 1.0, 0.0)

    xcol = xcol_ref[...]                          # (32, 512)

    # --- conv1 as one K=32 matmul (bias folded) + ReLU ---
    h1 = jnp.maximum(
        jnp.dot(w1_ref[...], xcol, preferred_element_type=jnp.float32), 0.0)
    # --- 1x1 conv #2 + bias + ReLU ---
    h2 = jnp.maximum(
        jnp.dot(w2_ref[...], h1, preferred_element_type=jnp.float32)
        + b2_ref[...], 0.0)
    # --- 1x1 conv #3 + bias + ReLU ---
    y = jnp.maximum(
        jnp.dot(w3_ref[...], h2, preferred_element_type=jnp.float32)
        + b3_ref[...], 0.0)

    # unmasked, lane-dense (8, 256) stores; lane offset 256 is tile-aligned
    o_ref[0] = y[:, :HW]
    o_ref[1] = y[:, HW:]


# --------------------------------- wrapper -------------------------------------
@jax.jit
def conv_pppad_forward(x_nchw, w1_packed, w2, b2, w3, b3):
    # x_nchw: (N, C_IN, H, W) float32.  Merging the trailing contiguous dims is free.
    x_flat = x_nchw.reshape(N, C_IN, HW)

    flops = 2 * TOTAL * (C_HID * K_IM2COL + C_HID * C_HID + C_OUT * C_HID)
    bytes_accessed = 4 * (x_flat.size + w1_packed.size + w2.size + b2.size
                          + w3.size + b3.size + N * C_OUT * HW)

    vmem = pltpu.MemorySpace.VMEM
    out = pl.pallas_call(
        conv_pppad_kernel,
        out_shape=jax.ShapeDtypeStruct((N, C_OUT, HW), jnp.float32),
        in_specs=[pl.BlockSpec(memory_space=vmem)] * 6,
        out_specs=pl.BlockSpec(memory_space=vmem),
        scratch_shapes=[pltpu.VMEM((K_IM2COL, TOTAL), jnp.float32)],
        cost_estimate=pl.CostEstimate(flops=flops, transcendentals=0,
                                      bytes_accessed=bytes_accessed),
    )(x_flat, w1_packed, w2, b2, w3, b3)

    # TODO(synk): downstream consumers could take the lane-dense padded
    # (N, C_OUT, H, W) slab directly and defer this crop; it is kept here so the
    # wrapper matches the module's (N, C_OUT, H, W_OUT) forward semantics.
    return out.reshape(N, C_OUT, H, W)[:, :, :, :W_OUT]


def pack_weights(pt_w1, pt_b1, pt_w2, pt_b2, pt_w3, pt_b3):
    # conv1: (C_HID, C_IN, 1, KW) -> (C_HID, KW, C_IN); pad taps 7->8; flatten
    # to (C_HID, 32) with column = tap*4 + channel; fold b1 into column 28.
    w1_kc = jnp.transpose(pt_w1[:, :, 0, :], (0, 2, 1))          # (C_HID, KW, C_IN)
    w1_kc = jnp.pad(w1_kc, ((0, 0), (0, 1), (0, 0)))             # (C_HID, 8, C_IN)
    w1_packed = w1_kc.reshape(C_HID, K_IM2COL)
    w1_packed = w1_packed.at[:, BIAS_ROW].set(pt_b1)
    # 1x1 convs stay in (out, in) orientation because the kernel computes W @ X
    w2 = pt_w2[:, :, 0, 0]                                       # (C_HID, C_HID)
    w3 = pt_w3[:, :, 0, 0]                                       # (C_OUT, C_HID)
    b2 = pt_b2.reshape(C_HID, 1)
    b3 = pt_b3.reshape(C_OUT, 1)
    return w1_packed, w2, b2, w3, b3


# ------------------------- plain-JAX reference (NCHW) --------------------------
def reference_forward(x, pt_w1, pt_b1, pt_w2, pt_b2, pt_w3, pt_b3):
    dn = ("NCHW", "OIHW", "NCHW")
    y = jax.lax.conv_general_dilated(x, pt_w1, (1, 1),
                                     ((0, 0), (PAD_W, PAD_W)),
                                     dimension_numbers=dn)
    y = jnp.maximum(y + pt_b1[None, :, None, None], 0.0)
    y = jax.lax.conv_general_dilated(y, pt_w2, (1, 1), ((0, 0), (0, 0)),
                                     dimension_numbers=dn)
    y = jnp.maximum(y + pt_b2[None, :, None, None], 0.0)
    y = jax.lax.conv_general_dilated(y, pt_w3, (1, 1), ((0, 0), (0, 0)),
                                     dimension_numbers=dn)
    y = jnp.maximum(y + pt_b3[None, :, None, None], 0.0)
    return y


if __name__ == "__main__":
    key = jax.random.PRNGKey(0)
    kx, k1, kb1, k2, kb2, k3, kb3 = jax.random.split(key, 7)

    # input
    x = jax.random.normal(kx, (N, C_IN, H, W), jnp.float32)

    # parameters in PyTorch (OIHW) convention, deterministic init
    pt_w1 = 0.1 * jax.random.normal(k1, (C_HID, C_IN, KH, KW), jnp.float32)
    pt_b1 = 0.1 * jax.random.normal(kb1, (C_HID,), jnp.float32)
    pt_w2 = 0.1 * jax.random.normal(k2, (C_HID, C_HID, 1, 1), jnp.float32)
    pt_b2 = 0.1 * jax.random.normal(kb2, (C_HID,), jnp.float32)
    pt_w3 = 0.1 * jax.random.normal(k3, (C_OUT, C_HID, 1, 1), jnp.float32)
    pt_b3 = 0.1 * jax.random.normal(kb3, (C_OUT,), jnp.float32)

    w1_packed, w2, b2, w3, b3 = pack_weights(pt_w1, pt_b1, pt_w2, pt_b2,
                                             pt_w3, pt_b3)

    out = conv_pppad_forward(x, w1_packed, w2, b2, w3, b3)
    out = jax.block_until_ready(out)

    ref = reference_forward(x, pt_w1, pt_b1, pt_w2, pt_b2, pt_w3, pt_b3)
    np.testing.assert_allclose(np.asarray(out), np.asarray(ref),
                               rtol=1e-4, atol=1e-4)

    assert out.shape == (N, C_OUT, H, W_OUT)
    print("KERNEL_OK")
</pallas_src>

<mosaic_0001>
module attributes {stable_mosaic.version = 11 : i64} {
  func.func @conv_pppad_kernel(%arg0: memref<2x4x256xf32, #tpu.memory_space<vmem>>, %arg1: memref<32x32xf32, #tpu.memory_space<vmem>>, %arg2: memref<32x32xf32, #tpu.memory_space<vmem>>, %arg3: memref<32x1xf32, #tpu.memory_space<vmem>>, %arg4: memref<8x32xf32, #tpu.memory_space<vmem>>, %arg5: memref<8x1xf32, #tpu.memory_space<vmem>>, %arg6: memref<2x8x256xf32, #tpu.memory_space<vmem>>, %arg7: memref<32x512xf32, #tpu.memory_space<vmem>>) attributes {dimension_semantics = [], scalar_prefetch = 0 : i64, scratch_operands = 1 : i64, tpu.core_type = #tpu.core_type<tc>} {
    %c0 = arith.constant 0 : index
    %c0_0 = arith.constant 0 : index
    %c0_1 = arith.constant 0 : index
    %0 = vector.load %arg0[%c0, %c0_0, %c0_1] : memref<2x4x256xf32, #tpu.memory_space<vmem>>, vector<1x4x256xf32>
    %1 = vector.shape_cast %0 : vector<1x4x256xf32> to vector<4x256xf32>
    %c1 = arith.constant 1 : index
    %c0_2 = arith.constant 0 : index
    %c0_3 = arith.constant 0 : index
    %2 = vector.load %arg0[%c1, %c0_2, %c0_3] : memref<2x4x256xf32, #tpu.memory_space<vmem>>, vector<1x4x256xf32>
    %3 = vector.shape_cast %2 : vector<1x4x256xf32> to vector<4x256xf32>
    %4 = tpu.concatenate %1, %3 in 1 : vector<4x256xf32>, vector<4x256xf32> -> vector<4x512xf32>
    %5 = tpu.iota {dimensions = array<i32: 1>} : vector<4x512xi32>
    %c16_i32 = arith.constant 16 : i32
    %c0_i32 = arith.constant 0 : i32
    %6 = arith.cmpi eq, %c16_i32, %c0_i32 : i32
    %c1_i32 = arith.constant 1 : i32
    %7 = arith.select %6, %c1_i32, %c16_i32 : i32
    %8 = vector.broadcast %7 : i32 to vector<4x512xi32>
    %9 = arith.remsi %5, %8 : vector<4x512xi32>
    %c0_i32_4 = arith.constant 0 : i32
    %10 = vector.broadcast %c0_i32_4 : i32 to vector<4x512xi32>
    %11 = arith.cmpi ne, %9, %10 : vector<4x512xi32>
    %c0_i32_5 = arith.constant 0 : i32
    %12 = vector.broadcast %c0_i32_5 : i32 to vector<4x512xi32>
    %13 = arith.cmpi slt, %9, %12 : vector<4x512xi32>
    %c0_i32_6 = arith.constant 0 : i32
    %14 = arith.cmpi slt, %7, %c0_i32_6 : i32
    %15 = vector.broadcast %14 : i1 to vector<4x512xi1>
    %16 = vector.broadcast %15 : vector<4x512xi1> to vector<4x512xi1>
    %17 = arith.xori %13, %16 : vector<4x512xi1>
    %18 = arith.andi %17, %11 : vector<4x512xi1>
    %19 = vector.broadcast %7 : i32 to vector<4x512xi32>
    %20 = arith.addi %9, %19 : vector<4x512xi32>
    %21 = arith.select %18, %20, %9 : vector<4x512xi1>, vector<4x512xi32>
    %c2_i32 = arith.constant 2 : i32
    %22 = tpu.dynamic_rotate %4 by %c2_i32 dim 1 : vector<4x512xf32>, i32 -> vector<4x512xf32>
    %c2_i32_7 = arith.constant 2 : i32
    %23 = vector.broadcast %c2_i32_7 : i32 to vector<4x512xi32>
    %24 = arith.cmpi sge, %21, %23 : vector<4x512xi32>
    %cst = arith.constant 0.000000e+00 : f32
    %25 = vector.broadcast %cst : f32 to vector<4x512xf32>
    %26 = arith.select %24, %22, %25 : vector<4x512xi1>, vector<4x512xf32>
    %c0_8 = arith.constant 0 : index
    %c0_9 = arith.constant 0 : index
    %27 = vector.load %arg7[%c0_8, %c0_9] : memref<32x512xf32, #tpu.memory_space<vmem>>, vector<4x512xf32>
    tpu.vector_store %arg7[%c0_8, %c0_9], %26 {strides = array<i32>} : memref<32x512xf32, #tpu.memory_space<vmem>>, vector<4x512xf32>,
    %c1_i32_10 = arith.constant 1 : i32
    %28 = tpu.dynamic_rotate %4 by %c1_i32_10 dim 1 : vector<4x512xf32>, i32 -> vector<4x512xf32>
    %c1_i32_11 = arith.constant 1 : i32
    %29 = vector.broadcast %c1_i32_11 : i32 to vector<4x512xi32>
    %30 = arith.cmpi sge, %21, %29 : vector<4x512xi32>
    %cst_12 = arith.constant 0.000000e+00 : f32
    %31 = vector.broadcast %cst_12 : f32 to vector<4x512xf32>
    %32 = arith.select %30, %28, %31 : vector<4x512xi1>, vector<4x512xf32>
    %c4 = arith.constant 4 : index
    %c0_13 = arith.constant 0 : index
    %33 = vector.load %arg7[%c4, %c0_13] : memref<32x512xf32, #tpu.memory_space<vmem>>, vector<4x512xf32>
    tpu.vector_store %arg7[%c4, %c0_13], %32 {strides = array<i32>} : memref<32x512xf32, #tpu.memory_space<vmem>>, vector<4x512xf32>,
    %c8 = arith.constant 8 : index
    %c0_14 = arith.constant 0 : index
    %34 = vector.load %arg7[%c8, %c0_14] : memref<32x512xf32, #tpu.memory_space<vmem>>, vector<4x512xf32>
    tpu.vector_store %arg7[%c8, %c0_14], %4 {strides = array<i32>} : memref<32x512xf32, #tpu.memory_space<vmem>>, vector<4x512xf32>,
    %c511_i32 = arith.constant 511 : i32
    %35 = tpu.dynamic_rotate %4 by %c511_i32 dim 1 : vector<4x512xf32>, i32 -> vector<4x512xf32>
    %c15_i32 = arith.constant 15 : i32
    %36 = vector.broadcast %c15_i32 : i32 to vector<4x512xi32>
    %37 = arith.cmpi slt, %21, %36 : vector<4x512xi32>
    %cst_15 = arith.constant 0.000000e+00 : f32
    %38 = vector.broadcast %cst_15 : f32 to vector<4x512xf32>
    %39 = arith.select %37, %35, %38 : vector<4x512xi1>, vector<4x512xf32>
    %c12 = arith.constant 12 : index
    %c0_16 = arith.constant 0 : index
    %40 = vector.load %arg7[%c12, %c0_16] : memref<32x512xf32, #tpu.memory_space<vmem>>, vector<4x512xf32>
    tpu.vector_store %arg7[%c12, %c0_16], %39 {strides = array<i32>} : memref<32x512xf32, #tpu.memory_space<vmem>>, vector<4x512xf32>,
    %c510_i32 = arith.constant 510 : i32
    %41 = tpu.dynamic_rotate %4 by %c510_i32 dim 1 : vector<4x512xf32>, i32 -> vector<4x512xf32>
    %c14_i32 = arith.constant 14 : i32
    %42 = vector.broadcast %c14_i32 : i32 to vector<4x512xi32>
    %43 = arith.cmpi slt, %21, %42 : vector<4x512xi32>
    %cst_17 = arith.constant 0.000000e+00 : f32
    %44 = vector.broadcast %cst_17 : f32 to vector<4x512xf32>
    %45 = arith.select %43, %41, %44 : vector<4x512xi1>, vector<4x512xf32>
    %c16 = arith.constant 16 : index
    %c0_18 = arith.constant 0 : index
    %46 = vector.load %arg7[%c16, %c0_18] : memref<32x512xf32, #tpu.memory_space<vmem>>, vector<4x512xf32>
    tpu.vector_store %arg7[%c16, %c0_18], %45 {strides = array<i32>} : memref<32x512xf32, #tpu.memory_space<vmem>>, vector<4x512xf32>,
    %c509_i32 = arith.constant 509 : i32
    %47 = tpu.dynamic_rotate %4 by %c509_i32 dim 1 : vector<4x512xf32>, i32 -> vector<4x512xf32>
    %c13_i32 = arith.constant 13 : i32
    %48 = vector.broadcast %c13_i32 : i32 to vector<4x512xi32>
    %49 = arith.cmpi slt, %21, %48 : vector<4x512xi32>
    %cst_19 = arith.constant 0.000000e+00 : f32
    %50 = vector.broadcast %cst_19 : f32 to vector<4x512xf32>
    %51 = arith.select %49, %47, %50 : vector<4x512xi1>, vector<4x512xf32>
    %c20 = arith.constant 20 : index
    %c0_20 = arith.constant 0 : index
    %52 = vector.load %arg7[%c20, %c0_20] : memref<32x512xf32, #tpu.memory_space<vmem>>, vector<4x512xf32>
    tpu.vector_store %arg7[%c20, %c0_20], %51 {strides = array<i32>} : memref<32x512xf32, #tpu.memory_space<vmem>>, vector<4x512xf32>,
    %c508_i32 = arith.constant 508 : i32
    %53 = tpu.dynamic_rotate %4 by %c508_i32 dim 1 : vector<4x512xf32>, i32 -> vector<4x512xf32>
    %c12_i32 = arith.constant 12 : i32
    %54 = vector.broadcast %c12_i32 : i32 to vector<4x512xi32>
    %55 = arith.cmpi slt, %21, %54 : vector<4x512xi32>
    %cst_21 = arith.constant 0.000000e+00 : f32
    %56 = vector.broadcast %cst_21 : f32 to vector<4x512xf32>
    %57 = arith.select %55, %53, %56 : vector<4x512xi1>, vector<4x512xf32>
    %c24 = arith.constant 24 : index
    %c0_22 = arith.constant 0 : index
    %58 = vector.load %arg7[%c24, %c0_22] : memref<32x512xf32, #tpu.memory_space<vmem>>, vector<4x512xf32>
    tpu.vector_store %arg7[%c24, %c0_22], %57 {strides = array<i32>} : memref<32x512xf32, #tpu.memory_space<vmem>>, vector<4x512xf32>,
    %59 = tpu.iota {dimensions = array<i32: 0>} : vector<4x512xi32>
    %c0_i32_23 = arith.constant 0 : i32
    %60 = vector.broadcast %c0_i32_23 : i32 to vector<4x512xi32>
    %61 = arith.cmpi eq, %59, %60 : vector<4x512xi32>
    %cst_24 = arith.constant 1.000000e+00 : f32
    %cst_25 = arith.constant 0.000000e+00 : f32
    %62 = vector.broadcast %cst_24 : f32 to vector<4x512xf32>
    %63 = vector.broadcast %cst_25 : f32 to vector<4x512xf32>
    %64 = arith.select %61, %62, %63 : vector<4x512xi1>, vector<4x512xf32>
    %c28 = arith.constant 28 : index
    %c0_26 = arith.constant 0 : index
    %65 = vector.load %arg7[%c28, %c0_26] : memref<32x512xf32, #tpu.memory_space<vmem>>, vector<4x512xf32>
    tpu.vector_store %arg7[%c28, %c0_26], %64 {strides = array<i32>} : memref<32x512xf32, #tpu.memory_space<vmem>>, vector<4x512xf32>,
    %c0_27 = arith.constant 0 : index
    %c0_28 = arith.constant 0 : index
    %66 = vector.load %arg7[%c0_27, %c0_28] : memref<32x512xf32, #tpu.memory_space<vmem>>, vector<32x512xf32>
    %c0_29 = arith.constant 0 : index
    %c0_30 = arith.constant 0 : index
    %67 = vector.load %arg1[%c0_29, %c0_30] : memref<32x32xf32, #tpu.memory_space<vmem>>, vector<32x32xf32>
    %cst_31 = arith.constant dense<0.000000e+00> : vector<32x512xf32>
    %68 = tpu.matmul %67, %66, %cst_31 {dimension_numbers = #tpu.dot_dimension_numbers<[1], [0], [0], [1], [0, 0, 1, 1], [], []>} : vector<32x32xf32>, vector<32x512xf32>, vector<32x512xf32> -> vector<32x512xf32>
    %cst_32 = arith.constant 0.000000e+00 : f32
    %69 = vector.broadcast %cst_32 : f32 to vector<32x512xf32>
    %70 = arith.maximumf %68, %69 : vector<32x512xf32>
    %c0_33 = arith.constant 0 : index
    %c0_34 = arith.constant 0 : index
    %71 = vector.load %arg2[%c0_33, %c0_34] : memref<32x32xf32, #tpu.memory_space<vmem>>, vector<32x32xf32>
    %cst_35 = arith.constant dense<0.000000e+00> : vector<32x512xf32>
    %72 = tpu.matmul %71, %70, %cst_35 {dimension_numbers = #tpu.dot_dimension_numbers<[1], [0], [0], [1], [0, 0, 1, 1], [], []>} : vector<32x32xf32>, vector<32x512xf32>, vector<32x512xf32> -> vector<32x512xf32>
    %c0_36 = arith.constant 0 : index
    %c0_37 = arith.constant 0 : index
    %73 = vector.load %arg3[%c0_36, %c0_37] : memref<32x1xf32, #tpu.memory_space<vmem>>, vector<32x1xf32>
    %74 = vector.broadcast %73 : vector<32x1xf32> to vector<32x512xf32>
    %75 = arith.addf %72, %74 : vector<32x512xf32>
    %cst_38 = arith.constant 0.000000e+00 : f32
    %76 = vector.broadcast %cst_38 : f32 to vector<32x512xf32>
    %77 = arith.maximumf %75, %76 : vector<32x512xf32>
    %c0_39 = arith.constant 0 : index
    %c0_40 = arith.constant 0 : index
    %78 = vector.load %arg4[%c0_39, %c0_40] : memref<8x32xf32, #tpu.memory_space<vmem>>, vector<8x32xf32>
    %cst_41 = arith.constant dense<0.000000e+00> : vector<8x512xf32>
    %79 = tpu.matmul %78, %77, %cst_41 {dimension_numbers = #tpu.dot_dimension_numbers<[1], [0], [0], [1], [0, 0, 1, 1], [], []>} : vector<8x32xf32>, vector<32x512xf32>, vector<8x512xf32> -> vector<8x512xf32>
    %c0_42 = arith.constant 0 : index
    %c0_43 = arith.constant 0 : index
    %80 = vector.load %arg5[%c0_42, %c0_43] : memref<8x1xf32, #tpu.memory_space<vmem>>, vector<8x1xf32>
    %81 = vector.broadcast %80 : vector<8x1xf32> to vector<8x512xf32>
    %82 = arith.addf %79, %81 : vector<8x512xf32>
    %cst_44 = arith.constant 0.000000e+00 : f32
    %83 = vector.broadcast %cst_44 : f32 to vector<8x512xf32>
    %84 = arith.maximumf %82, %83 : vector<8x512xf32>
    %85 = vector.extract_strided_slice %84 {offsets = [0, 0], sizes = [8, 256], strides = [1, 1]} : vector<8x512xf32> to vector<8x256xf32>
    %c0_45 = arith.constant 0 : index
    %c0_46 = arith.constant 0 : index
    %c0_47 = arith.constant 0 : index
    %86 = vector.load %arg6[%c0_45, %c0_46, %c0_47] : memref<2x8x256xf32, #tpu.memory_space<vmem>>, vector<1x8x256xf32>
    %87 = vector.shape_cast %86 : vector<1x8x256xf32> to vector<8x256xf32>
    %88 = vector.shape_cast %85 : vector<8x256xf32> to vector<1x8x256xf32>
    tpu.vector_store %arg6[%c0_45, %c0_46, %c0_47], %88 {strides = array<i32>} : memref<2x8x256xf32, #tpu.memory_space<vmem>>, vector<1x8x256xf32>,
    %89 = vector.extract_strided_slice %84 {offsets = [0, 256], sizes = [8, 256], strides = [1, 1]} : vector<8x512xf32> to vector<8x256xf32>
    %c1_48 = arith.constant 1 : index
    %c0_49 = arith.constant 0 : index
    %c0_50 = arith.constant 0 : index
    %90 = vector.load %arg6[%c1_48, %c0_49, %c0_50] : memref<2x8x256xf32, #tpu.memory_space<vmem>>, vector<1x8x256xf32>
    %91 = vector.shape_cast %90 : vector<1x8x256xf32> to vector<8x256xf32>
    %92 = vector.shape_cast %89 : vector<8x256xf32> to vector<1x8x256xf32>
    tpu.vector_store %arg6[%c1_48, %c0_49, %c0_50], %92 {strides = array<i32>} : memref<2x8x256xf32, #tpu.memory_space<vmem>>, vector<1x8x256xf32>,
    return
  }
}

</mosaic_0001>

<llo_original>
// kernel: conv_pppad_forward.1
$region0: #{conv_pppad_forward.1}
  #allocation0 [shape = 'u32[]', space=smem, size = 0x4, offset = 0x4, fixed_abs, tag = 'smem constant byte address 0x4 - core index']
  #allocation1 [shape = 'u32[144,128]{1,0:T(1,128)}', space=vmem, size = 0x12000, scoped, tag = 'internal scratch']
  #allocation2 [shape = 'f32[32,512]{1,0:T(8,128)}', space=vmem, size = 0x10000, scoped, tag = 'scratch operand']
  %s0 = inlined_call_operand.vmem [shape: f32[2,4,256], index: 0, kind: input, shape index: {}]
  %s1 = inlined_call_operand.vmem [shape: f32[32,32], index: 1, kind: input, shape index: {}]
  %s2 = inlined_call_operand.vmem [shape: f32[32,32], index: 2, kind: input, shape index: {}]
  %s3 = inlined_call_operand.vmem [shape: f32[32,1], index: 3, kind: input, shape index: {}]
  %s4 = inlined_call_operand.vmem [shape: f32[8,32], index: 4, kind: input, shape index: {}]
  %s5 = inlined_call_operand.vmem [shape: f32[8,1], index: 5, kind: input, shape index: {}]
  %s6 = inlined_call_operand.vmem [shape: f32[2,8,256], index: 6, kind: output, shape index: {}]
  %s7 = sld [smem:[#allocation0]]
  $region34: #{conv_pppad_forward.1} parent=0
    _
  %s9 = ssub.s32 1, %s7
  %s10 = scalar_select 0, %s9, %s7
  // Predicated region
  $region2: #{conv_pppad_forward.1} parent=0 // pred_check
    _
  $region3: #{conv_pppad_forward.1} parent=0 // pred_check_branch
    %12 = sbr.rel (0) target = $region5
  $region4: #{conv_pppad_forward.1} parent=0 // pred_region
    _
  $region5: #{conv_pppad_forward.1} parent=0 // pred_fallthru
    _
  // Predicated region
  $region6: #{conv_pppad_forward.1} parent=0 // pred_check
    _
  $region7: #{conv_pppad_forward.1} parent=0 // pred_check_branch
    %14 = sbr.rel (0) target = $region9
  $region8: #{conv_pppad_forward.1} parent=0 // pred_region
    _
  $region9: #{conv_pppad_forward.1} parent=0 // pred_fallthru
    _
  // Predicated region
  $region10: #{conv_pppad_forward.1} parent=0 // pred_check
    _
  $region11: #{conv_pppad_forward.1} parent=0 // pred_check_branch
    %16 = sbr.rel (0) target = $region13
  $region12: #{conv_pppad_forward.1} parent=0 // pred_region
    _
  $region13: #{conv_pppad_forward.1} parent=0 // pred_fallthru
    _
  // Predicated region
  $region14: #{conv_pppad_forward.1} parent=0 // pred_check
    _
  $region15: #{conv_pppad_forward.1} parent=0 // pred_check_branch
    %18 = sbr.rel (0) target = $region17
  $region16: #{conv_pppad_forward.1} parent=0 // pred_region
    _
  $region17: #{conv_pppad_forward.1} parent=0 // pred_fallthru
    _
  // Predicated region
  $region18: #{conv_pppad_forward.1} parent=0 // pred_check
    _
  $region19: #{conv_pppad_forward.1} parent=0 // pred_check_branch
    %20 = sbr.rel (0) target = $region21
  $region20: #{conv_pppad_forward.1} parent=0 // pred_region
    _
  $region21: #{conv_pppad_forward.1} parent=0 // pred_fallthru
    _
  // Predicated region
  $region22: #{conv_pppad_forward.1} parent=0 // pred_check
    _
  $region23: #{conv_pppad_forward.1} parent=0 // pred_check_branch
    %22 = sbr.rel (0) target = $region25
  $region24: #{conv_pppad_forward.1} parent=0 // pred_region
    _
  $region25: #{conv_pppad_forward.1} parent=0 // pred_fallthru
    _
  %v23 = vld [vmem:[%s0] sm:$0xff]
  %s24 = scalar_lea.vmem %s0, 8
  %v25 = vld [vmem:[%s24] sm:$0xff]
  %v27 = vcombine.high %v23, %v23
  %v30 = vcombine.high %v25, %v25
  %v32 = vlaneseq
  %v33 = vand.u32 %v32, 127
  %v34 = vadd.s32 %v33, 128
  %v35 = vadd.s32 %v33, 256
  %v36 = vadd.s32 %v33, 384
  %vm37 = vcmp.lt.s32.totalorder %v33, 0
  %v38 = vsub.s32 0, %v33
  %v39 = vsel %vm37, %v38, %v33
  %v40 = vshrl.u32 %v39, 4
  %v41 = vand.u32 %v39, 15
  %v42 = vsub.s32 0, %v41
  %v43 = vsel %vm37, %v42, %v41
  %vm44 = vcmp.lt.s32.totalorder %v34, 0
  %v45 = vsub.s32 0, %v34
  %v46 = vsel %vm44, %v45, %v34
  %v47 = vshrl.u32 %v46, 4
  %v48 = vand.u32 %v46, 15
  %v49 = vsub.s32 0, %v48
  %v50 = vsel %vm44, %v49, %v48
  %vm51 = vcmp.lt.s32.totalorder %v35, 0
  %v52 = vsub.s32 0, %v35
  %v53 = vsel %vm51, %v52, %v35
  %v54 = vshrl.u32 %v53, 4
  %v55 = vand.u32 %v53, 15
  %v56 = vsub.s32 0, %v55
  %v57 = vsel %vm51, %v56, %v55
  %vm58 = vcmp.lt.s32.totalorder %v36, 0
  %v59 = vsub.s32 0, %v36
  %v60 = vsel %vm58, %v59, %v36
  %v61 = vshrl.u32 %v60, 4
  %v62 = vand.u32 %v60, 15
  %v63 = vsub.s32 0, %v62
  %v64 = vsel %vm58, %v63, %v62
  %vm65 = vcmp.ne.s32.totalorder %v43, 0
  %vm66 = vcmp.ne.s32.totalorder %v50, 0
  %vm67 = vcmp.ne.s32.totalorder %v57, 0
  %vm68 = vcmp.ne.s32.totalorder %v64, 0
  %vm69 = vcmp.lt.s32.totalorder %v43, 0
  %vm70 = vcmp.lt.s32.totalorder %v50, 0
  %vm71 = vcmp.lt.s32.totalorder %v57, 0
  %vm72 = vcmp.lt.s32.totalorder %v64, 0
  %vm73 = vmand %vm69, %vm65
  %vm74 = vmand %vm70, %vm66
  %vm75 = vmand %vm71, %vm67
  %vm76 = vmand %vm72, %vm68
  %v77 = vadd.s32 %v43, 16
  %v78 = vadd.s32 %v50, 16
  %v79 = vadd.s32 %v57, 16
  %v80 = vadd.s32 %v64, 16
  %v81 = vsel %vm73, %v77, %v43
  %v82 = vsel %vm74, %v78, %v50
  %v83 = vsel %vm75, %v79, %v57
  %v84 = vsel %vm76, %v80, %v64
  %85 = vrot.lane.b32.xlu0 %v23, 2
  %v86 = vpop.permute.xlu0 %85
  %87 = vrot.lane.b32.xlu0 %v27, 2
  %v88 = vpop.permute.xlu0 %87
  %89 = vrot.lane.b32.xlu0 %v25, 2
  %v90 = vpop.permute.xlu0 %89
  %91 = vrot.lane.b32.xlu0 %v30, 2
  %v92 = vpop.permute.xlu0 %91
  %vm93 = vcmp.lt.s32.totalorder %v33, 2
  %v94 = vsel %vm93, %v90, %v92
  %v95 = vsel %vm93, %v88, %v90
  %v96 = vsel %vm93, %v86, %v88
  %v97 = vsel %vm93, %v92, %v86
  %vm98 = vcmp.ge.s32.totalorder %v81, 2
  %vm99 = vcmp.ge.s32.totalorder %v82, 2
  %vm100 = vcmp.ge.s32.totalorder %v83, 2
  %vm101 = vcmp.ge.s32.totalorder %v84, 2
  %v102 = vsel %vm98, %v97, 0.0
  %v103 = vsel %vm99, %v96, 0.0
  %v104 = vsel %vm100, %v95, 0.0
  %v105 = vsel %vm101, %v94, 0.0
  %106 = vst [vmem:[#allocation2] sm:$0xf] %v102
  %107 = vst [vmem:[#allocation2 + $0x8] sm:$0xf] %v103
  %108 = vst [vmem:[#allocation2 + $0x10] sm:$0xf] %v104
  %109 = vst [vmem:[#allocation2 + $0x18] sm:$0xf] %v105
  %110 = vrot.lane.b32.xlu0 %v23, 1
  %v111 = vpop.permute.xlu0 %110
  %112 = vrot.lane.b32.xlu0 %v27, 1
  %v113 = vpop.permute.xlu0 %112
  %114 = vrot.lane.b32.xlu0 %v25, 1
  %v115 = vpop.permute.xlu0 %114
  %116 = vrot.lane.b32.xlu0 %v30, 1
  %v117 = vpop.permute.xlu0 %116
  %vm118 = vcmp.lt.s32.totalorder %v33, 1
  %v119 = vsel %vm118, %v115, %v117
  %v120 = vsel %vm118, %v113, %v115
  %v121 = vsel %vm118, %v111, %v113
  %v122 = vsel %vm118, %v117, %v111
  %vm123 = vcmp.ge.s32.totalorder %v81, 1
  %vm124 = vcmp.ge.s32.totalorder %v82, 1
  %vm125 = vcmp.ge.s32.totalorder %v83, 1
  %vm126 = vcmp.ge.s32.totalorder %v84, 1
  %v127 = vsel %vm123, %v122, 0.0
  %v128 = vsel %vm124, %v121, 0.0
  %v129 = vsel %vm125, %v120, 0.0
  %v130 = vsel %vm126, %v119, 0.0
  %v135 = vrot.slane %v127, 4
  %v136 = vrot.slane %v128, 4
  %v137 = vrot.slane %v129, 4
  %v138 = vrot.slane %v130, 4
  %143 = vst [vmem:[#allocation2] sm:$0xf0] %v135
  %144 = vst [vmem:[#allocation2 + $0x8] sm:$0xf0] %v136
  %145 = vst [vmem:[#allocation2 + $0x10] sm:$0xf0] %v137
  %146 = vst [vmem:[#allocation2 + $0x18] sm:$0xf0] %v138
  %147 = vst [vmem:[#allocation2 + $0x20] sm:$0xf] %v23
  %148 = vst [vmem:[#allocation2 + $0x28] sm:$0xf] %v27
  %149 = vst [vmem:[#allocation2 + $0x30] sm:$0xf] %v25
  %150 = vst [vmem:[#allocation2 + $0x38] sm:$0xf] %v30
  %151 = vrot.lane.b32.xlu0 %v23, 127
  %v152 = vpop.permute.xlu0 %151
  %153 = vrot.lane.b32.xlu0 %v27, 127
  %v154 = vpop.permute.xlu0 %153
  %155 = vrot.lane.b32.xlu0 %v25, 127
  %v156 = vpop.permute.xlu0 %155
  %157 = vrot.lane.b32.xlu0 %v30, 127
  %v158 = vpop.permute.xlu0 %157
  %vm159 = vcmp.lt.s32.totalorder %v33, 127
  %v160 = vsel %vm159, %v156, %v158
  %v161 = vsel %vm159, %v154, %v156
  %v162 = vsel %vm159, %v152, %v154
  %v163 = vsel %vm159, %v158, %v152
  %vm164 = vcmp.lt.s32.totalorder %v81, 15
  %vm165 = vcmp.lt.s32.totalorder %v82, 15
  %vm166 = vcmp.lt.s32.totalorder %v83, 15
  %vm167 = vcmp.lt.s32.totalorder %v84, 15
  %v168 = vsel %vm164, %v162, 0.0
  %v169 = vsel %vm165, %v161, 0.0
  %v170 = vsel %vm166, %v160, 0.0
  %v171 = vsel %vm167, %v163, 0.0
  %v176 = vrot.slane %v168, 4
  %v177 = vrot.slane %v169, 4
  %v178 = vrot.slane %v170, 4
  %v179 = vrot.slane %v171, 4
  %184 = vst [vmem:[#allocation2 + $0x20] sm:$0xf0] %v176
  %185 = vst [vmem:[#allocation2 + $0x28] sm:$0xf0] %v177
  %186 = vst [vmem:[#allocation2 + $0x30] sm:$0xf0] %v178
  %187 = vst [vmem:[#allocation2 + $0x38] sm:$0xf0] %v179
  %188 = vrot.lane.b32.xlu0 %v23, 126
  %v189 = vpop.permute.xlu0 %188
  %190 = vrot.lane.b32.xlu0 %v27, 126
  %v191 = vpop.permute.xlu0 %190
  %192 = vrot.lane.b32.xlu0 %v25, 126
  %v193 = vpop.permute.xlu0 %192
  %194 = vrot.lane.b32.xlu0 %v30, 126
  %v195 = vpop.permute.xlu0 %194
  %vm196 = vcmp.lt.s32.totalorder %v33, 126
  %v197 = vsel %vm196, %v193, %v195
  %v198 = vsel %vm196, %v191, %v193
  %v199 = vsel %vm196, %v189, %v191
  %v200 = vsel %vm196, %v195, %v189
  %vm201 = vcmp.lt.s32.totalorder %v81, 14
  %vm202 = vcmp.lt.s32.totalorder %v82, 14
  %vm203 = vcmp.lt.s32.totalorder %v83, 14
  %vm204 = vcmp.lt.s32.totalorder %v84, 14
  %v205 = vsel %vm201, %v199, 0.0
  %v206 = vsel %vm202, %v198, 0.0
  %v207 = vsel %vm203, %v197, 0.0
  %v208 = vsel %vm204, %v200, 0.0
  %209 = vst [vmem:[#allocation2 + $0x40] sm:$0xf] %v205
  %210 = vst [vmem:[#allocation2 + $0x48] sm:$0xf] %v206
  %211 = vst [vmem:[#allocation2 + $0x50] sm:$0xf] %v207
  %212 = vst [vmem:[#allocation2 + $0x58] sm:$0xf] %v208
  %213 = vrot.lane.b32.xlu0 %v23, 125
  %v214 = vpop.permute.xlu0 %213
  %215 = vrot.lane.b32.xlu0 %v27, 125
  %v216 = vpop.permute.xlu0 %215
  %217 = vrot.lane.b32.xlu0 %v25, 125
  %v218 = vpop.permute.xlu0 %217
  %219 = vrot.lane.b32.xlu0 %v30, 125
  %v220 = vpop.permute.xlu0 %219
  %vm221 = vcmp.lt.s32.totalorder %v33, 125
  %v222 = vsel %vm221, %v218, %v220
  %v223 = vsel %vm221, %v216, %v218
  %v224 = vsel %vm221, %v214, %v216
  %v225 = vsel %vm221, %v220, %v214
  %vm226 = vcmp.lt.s32.totalorder %v81, 13
  %vm227 = vcmp.lt.s32.totalorder %v82, 13
  %vm228 = vcmp.lt.s32.totalorder %v83, 13
  %vm229 = vcmp.lt.s32.totalorder %v84, 13
  %v230 = vsel %vm226, %v224, 0.0
  %v231 = vsel %vm227, %v223, 0.0
  %v232 = vsel %vm228, %v222, 0.0
  %v233 = vsel %vm229, %v225, 0.0
  %v238 = vrot.slane %v230, 4
  %v239 = vrot.slane %v231, 4
  %v240 = vrot.slane %v232, 4
  %v241 = vrot.slane %v233, 4
  %246 = vst [vmem:[#allocation2 + $0x40] sm:$0xf0] %v238
  %247 = vst [vmem:[#allocation2 + $0x48] sm:$0xf0] %v239
  %248 = vst [vmem:[#allocation2 + $0x50] sm:$0xf0] %v240
  %249 = vst [vmem:[#allocation2 + $0x58] sm:$0xf0] %v241
  %250 = vrot.lane.b32.xlu0 %v23, 124
  %v251 = vpop.permute.xlu0 %250
  %252 = vrot.lane.b32.xlu0 %v27, 124
  %v253 = vpop.permute.xlu0 %252
  %254 = vrot.lane.b32.xlu0 %v25, 124
  %v255 = vpop.permute.xlu0 %254
  %256 = vrot.lane.b32.xlu0 %v30, 124
  %v257 = vpop.permute.xlu0 %256
  %vm258 = vcmp.lt.s32.totalorder %v33, 124
  %v259 = vsel %vm258, %v255, %v257
  %v260 = vsel %vm258, %v253, %v255
  %v261 = vsel %vm258, %v251, %v253
  %v262 = vsel %vm258, %v257, %v251
  %vm263 = vcmp.lt.s32.totalorder %v81, 12
  %vm264 = vcmp.lt.s32.totalorder %v82, 12
  %vm265 = vcmp.lt.s32.totalorder %v83, 12
  %vm266 = vcmp.lt.s32.totalorder %v84, 12
  %v267 = vsel %vm263, %v261, 0.0
  %v268 = vsel %vm264, %v260, 0.0
  %v269 = vsel %vm265, %v259, 0.0
  %v270 = vsel %vm266, %v262, 0.0
  %271 = vst [vmem:[#allocation2 + $0x60] sm:$0xf] %v267
  %272 = vst [vmem:[#allocation2 + $0x68] sm:$0xf] %v268
  %273 = vst [vmem:[#allocation2 + $0x70] sm:$0xf] %v269
  %274 = vst [vmem:[#allocation2 + $0x78] sm:$0xf] %v270
  %v275 = vlaneseq
  %v276 = vshrl.u32 %v275, 7
  %vm277 = vcmp.eq.s32.totalorder %v276, 0
  %v278 = vsel %vm277, 1.0, 0.0
  %v280 = vrot.slane %v278, 4
  %282 = vst [vmem:[#allocation2 + $0x60] sm:$0xf0] %v280
  %283 = vst [vmem:[#allocation2 + $0x68] sm:$0xf0] %v280
  %284 = vst [vmem:[#allocation2 + $0x70] sm:$0xf0] %v280
  %285 = vst [vmem:[#allocation2 + $0x78] sm:$0xf0] %v280
  %v286 = vld [vmem:[#allocation2] sm:$0xff]
  %v287 = vld [vmem:[#allocation2 + $0x8] sm:$0xff]
  %v288 = vld [vmem:[#allocation2 + $0x10] sm:$0xff]
  %v289 = vld [vmem:[#allocation2 + $0x18] sm:$0xff]
  %v290 = vld [vmem:[#allocation2 + $0x20] sm:$0xff]
  %v291 = vld [vmem:[#allocation2 + $0x28] sm:$0xff]
  %v292 = vld [vmem:[#allocation2 + $0x30] sm:$0xff]
  %v293 = vld [vmem:[#allocation2 + $0x38] sm:$0xff]
  %v294 = vld [vmem:[#allocation2 + $0x40] sm:$0xff]
  %v295 = vld [vmem:[#allocation2 + $0x48] sm:$0xff]
  %v296 = vld [vmem:[#allocation2 + $0x50] sm:$0xff]
  %v297 = vld [vmem:[#allocation2 + $0x58] sm:$0xff]
  %v298 = vld [vmem:[#allocation2 + $0x60] sm:$0xff]
  %v299 = vld [vmem:[#allocation2 + $0x68] sm:$0xff]
  %v300 = vld [vmem:[#allocation2 + $0x70] sm:$0xff]
  %v301 = vld [vmem:[#allocation2 + $0x78] sm:$0xff]
  %v302 = vld [vmem:[%s1] sm:$0xff]
  %v303 = vld [vmem:[%s1 + $0x8] sm:$0xff]
  %v304 = vld [vmem:[%s1 + $0x10] sm:$0xff]
  %v305 = vld [vmem:[%s1 + $0x18] sm:$0xff]
  %vm306 = vcmask 261120
  %v308 = vsel %vm306, %v302, 0
  %v311 = vsel %vm306, %v303, 0
  %v314 = vsel %vm306, %v304, 0
  %v317 = vsel %vm306, %v305, 0
  %319 = vmatprep.subr.mxu0 0.0
  %320 = vmatpush1.msra.mxu0 0.0
  %321 = vmatprep.subr.mxu0 0.0
  %322 = vmatpush1.msra.mxu0 0.0
  %323 = vmatprep.subr.mxu0 0.0
  %324 = vmatpush1.msra.mxu0 0.0
  %325 = vmatprep.subr.mxu0 0.0
  %326 = vmatpush1.msra.mxu0 0.0
  %327 = vmatprep.subr.mxu0 0.0
  %328 = vmatpush1.msra.mxu0 0.0
  %329 = vmatprep.subr.mxu0 0.0
  %330 = vmatpush1.msra.mxu0 0.0
  %331 = vmatprep.subr.mxu0 0.0
  %332 = vmatpush1.msra.mxu0 0.0
  %333 = vmatprep.subr.mxu0 0.0
  %334 = vmatpush1.msra.mxu0 0.0
  %335 = vmatprep.subr.mxu0 0.0
  %336 = vmatpush1.msra.mxu0 0.0
  %337 = vmatprep.subr.mxu0 0.0
  %338 = vmatpush1.msra.mxu0 0.0
  %339 = vmatprep.subr.mxu0 0.0
  %340 = vmatpush1.msra.mxu0 0.0
  %341 = vmatprep.subr.mxu0 0.0
  %342 = vmatpush1.msra.mxu0 0.0
  %343 = vmatprep.subr.mxu0 %v299
  %344 = vmatpush1.msra.mxu0 %v298
  %345 = vmatprep.subr.mxu0 %v295
  %346 = vmatpush1.msra.mxu0 %v294
  %347 = vmatprep.subr.mxu0 %v291
  %348 = vmatpush1.msra.mxu0 %v290
  %349 = vmatprep.subr.mxu0 %v287
  %350 = vmatpush1.msra.mxu0 %v286
  %351 = vmatprep.subr.mxu0 0.0
  %352 = vmatpush2.msra.mxu0 0.0
  %353 = vmatprep.subr.mxu0 0.0
  %354 = vmatpush2.msra.mxu0 0.0
  %355 = vmatprep.subr.mxu0 0.0
  %356 = vmatpush2.msra.mxu0 0.0
  %357 = vmatprep.subr.mxu0 0.0
  %358 = vmatpush2.msra.mxu0 0.0
  %359 = vmatprep.subr.mxu0 0.0
  %360 = vmatpush2.msra.mxu0 0.0
  %361 = vmatprep.subr.mxu0 0.0
  %362 = vmatpush2.msra.mxu0 0.0
  %363 = vmatprep.subr.mxu0 0.0
  %364 = vmatpush2.msra.mxu0 0.0
  %365 = vmatprep.subr.mxu0 0.0
  %366 = vmatpush2.msra.mxu0 0.0
  %367 = vmatprep.subr.mxu0 0.0
  %368 = vmatpush2.msra.mxu0 0.0
  %369 = vmatprep.subr.mxu0 0.0
  %370 = vmatpush2.msra.mxu0 0.0
  %371 = vmatprep.subr.mxu0 0.0
  %372 = vmatpush2.msra.mxu0 0.0
  %373 = vmatprep.subr.mxu0 0.0
  %374 = vmatpush2.msra.mxu0 0.0
  %375 = vmatprep.subr.mxu0 0.0
  %376 = vmatpush2.msra.mxu0 0.0
  %377 = vmatprep.subr.mxu0 0.0
  %378 = vmatpush2.msra.mxu0 0.0
  %379 = vmatprep.subr.mxu0 0.0
  %380 = vmatpush2.msra.mxu0 0.0
  %381 = vmatprep.subr.mxu0 0.0
  %382 = vmatpush2.msra.mxu0 0.0
  %383 = vmatprep.mubr.f32.mxu0 0.0
  %384 = vmatmul.mubr.f32.gmra.mxu0 %v308
  %v385 = vpop.f32.mrf.mxu0
  %v386 = vadd.f32 0.0, %v385
  %v387 = vpop.f32.mrf.mxu0
  %v388 = vadd.f32 0.0, %v387
  %389 = vmatprep.mubr.f32.mxu0 0.0
  %390 = vmatmul.mubr.f32.gmra.mxu0 %v311
  %v391 = vpop.f32.mrf.mxu0
  %v392 = vadd.f32 0.0, %v391
  %v393 = vpop.f32.mrf.mxu0
  %v394 = vadd.f32 0.0, %v393
  %395 = vmatprep.mubr.f32.mxu0 0.0
  %396 = vmatmul.mubr.f32.gmra.mxu0 %v314
  %v397 = vpop.f32.mrf.mxu0
  %v398 = vadd.f32 0.0, %v397
  %v399 = vpop.f32.mrf.mxu0
  %v400 = vadd.f32 0.0, %v399
  %401 = vmatprep.mubr.f32.mxu0 0.0
  %402 = vmatmul.mubr.f32.gmra.mxu0 %v317
  %v403 = vpop.f32.mrf.mxu0
  %v404 = vadd.f32 0.0, %v403
  %v405 = vpop.f32.mrf.mxu0
  %v406 = vadd.f32 0.0, %v405
  %407 = vdwg.mxu0
  %408 = vmatprep.subr.mxu0 0.0
  %409 = vmatpush1.msra.mxu0 0.0
  %410 = vmatprep.subr.mxu0 0.0
  %411 = vmatpush1.msra.mxu0 0.0
  %412 = vmatprep.subr.mxu0 0.0
  %413 = vmatpush1.msra.mxu0 0.0
  %414 = vmatprep.subr.mxu0 0.0
  %415 = vmatpush1.msra.mxu0 0.0
  %416 = vmatprep.subr.mxu0 0.0
  %417 = vmatpush1.msra.mxu0 0.0
  %418 = vmatprep.subr.mxu0 0.0
  %419 = vmatpush1.msra.mxu0 0.0
  %420 = vmatprep.subr.mxu0 0.0
  %421 = vmatpush1.msra.mxu0 0.0
  %422 = vmatprep.subr.mxu0 0.0
  %423 = vmatpush1.msra.mxu0 0.0
  %424 = vmatprep.subr.mxu0 0.0
  %425 = vmatpush1.msra.mxu0 0.0
  %426 = vmatprep.subr.mxu0 0.0
  %427 = vmatpush1.msra.mxu0 0.0
  %428 = vmatprep.subr.mxu0 0.0
  %429 = vmatpush1.msra.mxu0 0.0
  %430 = vmatprep.subr.mxu0 0.0
  %431 = vmatpush1.msra.mxu0 0.0
  %432 = vmatprep.subr.mxu0 %v301
  %433 = vmatpush1.msra.mxu0 %v300
  %434 = vmatprep.subr.mxu0 %v297
  %435 = vmatpush1.msra.mxu0 %v296
  %436 = vmatprep.subr.mxu0 %v293
  %437 = vmatpush1.msra.mxu0 %v292
  %438 = vmatprep.subr.mxu0 %v289
  %439 = vmatpush1.msra.mxu0 %v288
  %440 = vmatprep.subr.mxu0 0.0
  %441 = vmatpush2.msra.mxu0 0.0
  %442 = vmatprep.subr.mxu0 0.0
  %443 = vmatpush2.msra.mxu0 0.0
  %444 = vmatprep.subr.mxu0 0.0
  %445 = vmatpush2.msra.mxu0 0.0
  %446 = vmatprep.subr.mxu0 0.0
  %447 = vmatpush2.msra.mxu0 0.0
  %448 = vmatprep.subr.mxu0 0.0
  %449 = vmatpush2.msra.mxu0 0.0
  %450 = vmatprep.subr.mxu0 0.0
  %451 = vmatpush2.msra.mxu0 0.0
  %452 = vmatprep.subr.mxu0 0.0
  %453 = vmatpush2.msra.mxu0 0.0
  %454 = vmatprep.subr.mxu0 0.0
  %455 = vmatpush2.msra.mxu0 0.0
  %456 = vmatprep.subr.mxu0 0.0
  %457 = vmatpush2.msra.mxu0 0.0
  %458 = vmatprep.subr.mxu0 0.0
  %459 = vmatpush2.msra.mxu0 0.0
  %460 = vmatprep.subr.mxu0 0.0
  %461 = vmatpush2.msra.mxu0 0.0
  %462 = vmatprep.subr.mxu0 0.0
  %463 = vmatpush2.msra.mxu0 0.0
  %464 = vmatprep.subr.mxu0 0.0
  %465 = vmatpush2.msra.mxu0 0.0
  %466 = vmatprep.subr.mxu0 0.0
  %467 = vmatpush2.msra.mxu0 0.0
  %468 = vmatprep.subr.mxu0 0.0
  %469 = vmatpush2.msra.mxu0 0.0
  %470 = vmatprep.subr.mxu0 0.0
  %471 = vmatpush2.msra.mxu0 0.0
  %472 = vmatprep.mubr.f32.mxu0 0.0
  %473 = vmatmul.mubr.f32.gmra.mxu0 %v308
  %v474 = vpop.f32.mrf.mxu0
  %v475 = vadd.f32 0.0, %v474
  %v476 = vpop.f32.mrf.mxu0
  %v477 = vadd.f32 0.0, %v476
  %478 = vmatprep.mubr.f32.mxu0 0.0
  %479 = vmatmul.mubr.f32.gmra.mxu0 %v311
  %v480 = vpop.f32.mrf.mxu0
  %v481 = vadd.f32 0.0, %v480
  %v482 = vpop.f32.mrf.mxu0
  %v483 = vadd.f32 0.0, %v482
  %484 = vmatprep.mubr.f32.mxu0 0.0
  %485 = vmatmul.mubr.f32.gmra.mxu0 %v314
  %v486 = vpop.f32.mrf.mxu0
  %v487 = vadd.f32 0.0, %v486
  %v488 = vpop.f32.mrf.mxu0
  %v489 = vadd.f32 0.0, %v488
  %490 = vmatprep.mubr.f32.mxu0 0.0
  %491 = vmatmul.mubr.f32.gmra.mxu0 %v317
  %v492 = vpop.f32.mrf.mxu0
  %v493 = vadd.f32 0.0, %v492
  %v494 = vpop.f32.mrf.mxu0
  %v495 = vadd.f32 0.0, %v494
  %496 = vdwg.mxu0
  %v497 = vmax.f32 %v386, 0.0
  %v498 = vmax.f32 %v388, 0.0
  %v499 = vmax.f32 %v475, 0.0
  %v500 = vmax.f32 %v477, 0.0
  %v501 = vmax.f32 %v392, 0.0
  %v502 = vmax.f32 %v394, 0.0
  %v503 = vmax.f32 %v481, 0.0
  %v504 = vmax.f32 %v483, 0.0
  %v505 = vmax.f32 %v398, 0.0
  %v506 = vmax.f32 %v400, 0.0
  %v507 = vmax.f32 %v487, 0.0
  %v508 = vmax.f32 %v489, 0.0
  %v509 = vmax.f32 %v404, 0.0
  %v510 = vmax.f32 %v406, 0.0
  %v511 = vmax.f32 %v493, 0.0
  %v512 = vmax.f32 %v495, 0.0
  %v513 = vld [vmem:[%s2] sm:$0xff]
  %v514 = vld [vmem:[%s2 + $0x8] sm:$0xff]
  %v515 = vld [vmem:[%s2 + $0x10] sm:$0xff]
  %v516 = vld [vmem:[%s2 + $0x18] sm:$0xff]
  %v517 = vld [vmem:[%s3] sm:$0xff]
  %v518 = vld [vmem:[%s3 + $0x8] sm:$0xff]
  %v519 = vld [vmem:[%s3 + $0x10] sm:$0xff]
  %v520 = vld [vmem:[%s3 + $0x18] sm:$0xff]
  %522 = vset.pattern.permute.xlu0 0
  %523 = vperm.xlu0 %522, %v517
  %v524 = vpop.permute.xlu0 %523
  %527 = vset.pattern.permute.xlu0 0
  %528 = vperm.xlu0 %527, %v518
  %v529 = vpop.permute.xlu0 %528
  %532 = vset.pattern.permute.xlu0 0
  %533 = vperm.xlu0 %532, %v519
  %v534 = vpop.permute.xlu0 %533
  %537 = vset.pattern.permute.xlu0 0
  %538 = vperm.xlu0 %537, %v520
  %v539 = vpop.permute.xlu0 %538
  %v542 = vsel %vm306, %v513, 0
  %v545 = vsel %vm306, %v514, 0
  %v548 = vsel %vm306, %v515, 0
  %v551 = vsel %vm306, %v516, 0
  %553 = vmatprep.subr.mxu0 0.0
  %554 = vmatpush1.msra.mxu0 0.0
  %555 = vmatprep.subr.mxu0 0.0
  %556 = vmatpush1.msra.mxu0 0.0
  %557 = vmatprep.subr.mxu0 0.0
  %558 = vmatpush1.msra.mxu0 0.0
  %559 = vmatprep.subr.mxu0 0.0
  %560 = vmatpush1.msra.mxu0 0.0
  %561 = vmatprep.subr.mxu0 0.0
  %562 = vmatpush1.msra.mxu0 0.0
  %563 = vmatprep.subr.mxu0 0.0
  %564 = vmatpush1.msra.mxu0 0.0
  %565 = vmatprep.subr.mxu0 0.0
  %566 = vmatpush1.msra.mxu0 0.0
  %567 = vmatprep.subr.mxu0 0.0
  %568 = vmatpush1.msra.mxu0 0.0
  %569 = vmatprep.subr.mxu0 0.0
  %570 = vmatpush1.msra.mxu0 0.0
  %571 = vmatprep.subr.mxu0 0.0
  %572 = vmatpush1.msra.mxu0 0.0
  %573 = vmatprep.subr.mxu0 0.0
  %574 = vmatpush1.msra.mxu0 0.0
  %575 = vmatprep.subr.mxu0 0.0
  %576 = vmatpush1.msra.mxu0 0.0
  %577 = vmatprep.subr.mxu0 %v510
  %578 = vmatpush1.msra.mxu0 %v509
  %579 = vmatprep.subr.mxu0 %v506
  %580 = vmatpush1.msra.mxu0 %v505
  %581 = vmatprep.subr.mxu0 %v502
  %582 = vmatpush1.msra.mxu0 %v501
  %583 = vmatprep.subr.mxu0 %v498
  %584 = vmatpush1.msra.mxu0 %v497
  %585 = vmatprep.subr.mxu0 0.0
  %586 = vmatpush2.msra.mxu0 0.0
  %587 = vmatprep.subr.mxu0 0.0
  %588 = vmatpush2.msra.mxu0 0.0
  %589 = vmatprep.subr.mxu0 0.0
  %590 = vmatpush2.msra.mxu0 0.0
  %591 = vmatprep.subr.mxu0 0.0
  %592 = vmatpush2.msra.mxu0 0.0
  %593 = vmatprep.subr.mxu0 0.0
  %594 = vmatpush2.msra.mxu0 0.0
  %595 = vmatprep.subr.mxu0 0.0
  %596 = vmatpush2.msra.mxu0 0.0
  %597 = vmatprep.subr.mxu0 0.0
  %598 = vmatpush2.msra.mxu0 0.0
  %599 = vmatprep.subr.mxu0 0.0
  %600 = vmatpush2.msra.mxu0 0.0
  %601 = vmatprep.subr.mxu0 0.0
  %602 = vmatpush2.msra.mxu0 0.0
  %603 = vmatprep.subr.mxu0 0.0
  %604 = vmatpush2.msra.mxu0 0.0
  %605 = vmatprep.subr.mxu0 0.0
  %606 = vmatpush2.msra.mxu0 0.0
  %607 = vmatprep.subr.mxu0 0.0
  %608 = vmatpush2.msra.mxu0 0.0
  %609 = vmatprep.subr.mxu0 0.0
  %610 = vmatpush2.msra.mxu0 0.0
  %611 = vmatprep.subr.mxu0 0.0
  %612 = vmatpush2.msra.mxu0 0.0
  %613 = vmatprep.subr.mxu0 0.0
  %614 = vmatpush2.msra.mxu0 0.0
  %615 = vmatprep.subr.mxu0 0.0
  %616 = vmatpush2.msra.mxu0 0.0
  %617 = vmatprep.mubr.f32.mxu0 0.0
  %618 = vmatmul.mubr.f32.gmra.mxu0 %v542
  %v619 = vpop.f32.mrf.mxu0
  %v620 = vadd.f32 %v524, %v619
  %v621 = vpop.f32.mrf.mxu0
  %v622 = vadd.f32 %v524, %v621
  %623 = vmatprep.mubr.f32.mxu0 0.0
  %624 = vmatmul.mubr.f32.gmra.mxu0 %v545
  %v625 = vpop.f32.mrf.mxu0
  %v626 = vadd.f32 %v529, %v625
  %v627 = vpop.f32.mrf.mxu0
  %v628 = vadd.f32 %v529, %v627
  %629 = vmatprep.mubr.f32.mxu0 0.0
  %630 = vmatmul.mubr.f32.gmra.mxu0 %v548
  %v631 = vpop.f32.mrf.mxu0
  %v632 = vadd.f32 %v534, %v631
  %v633 = vpop.f32.mrf.mxu0
  %v634 = vadd.f32 %v534, %v633
  %635 = vmatprep.mubr.f32.mxu0 0.0
  %636 = vmatmul.mubr.f32.gmra.mxu0 %v551
  %v637 = vpop.f32.mrf.mxu0
  %v638 = vadd.f32 %v539, %v637
  %v639 = vpop.f32.mrf.mxu0
  %v640 = vadd.f32 %v539, %v639
  %641 = vdwg.mxu0
  %642 = vmatprep.subr.mxu0 0.0
  %643 = vmatpush1.msra.mxu0 0.0
  %644 = vmatprep.subr.mxu0 0.0
  %645 = vmatpush1.msra.mxu0 0.0
  %646 = vmatprep.subr.mxu0 0.0
  %647 = vmatpush1.msra.mxu0 0.0
  %648 = vmatprep.subr.mxu0 0.0
  %649 = vmatpush1.msra.mxu0 0.0
  %650 = vmatprep.subr.mxu0 0.0
  %651 = vmatpush1.msra.mxu0 0.0
  %652 = vmatprep.subr.mxu0 0.0
  %653 = vmatpush1.msra.mxu0 0.0
  %654 = vmatprep.subr.mxu0 0.0
  %655 = vmatpush1.msra.mxu0 0.0
  %656 = vmatprep.subr.mxu0 0.0
  %657 = vmatpush1.msra.mxu0 0.0
  %658 = vmatprep.subr.mxu0 0.0
  %659 = vmatpush1.msra.mxu0 0.0
  %660 = vmatprep.subr.mxu0 0.0
  %661 = vmatpush1.msra.mxu0 0.0
  %662 = vmatprep.subr.mxu0 0.0
  %663 = vmatpush1.msra.mxu0 0.0
  %664 = vmatprep.subr.mxu0 0.0
  %665 = vmatpush1.msra.mxu0 0.0
  %666 = vmatprep.subr.mxu0 %v512
  %667 = vmatpush1.msra.mxu0 %v511
  %668 = vmatprep.subr.mxu0 %v508
  %669 = vmatpush1.msra.mxu0 %v507
  %670 = vmatprep.subr.mxu0 %v504
  %671 = vmatpush1.msra.mxu0 %v503
  %672 = vmatprep.subr.mxu0 %v500
  %673 = vmatpush1.msra.mxu0 %v499
  %674 = vmatprep.subr.mxu0 0.0
  %675 = vmatpush2.msra.mxu0 0.0
  %676 = vmatprep.subr.mxu0 0.0
  %677 = vmatpush2.msra.mxu0 0.0
  %678 = vmatprep.subr.mxu0 0.0
  %679 = vmatpush2.msra.mxu0 0.0
  %680 = vmatprep.subr.mxu0 0.0
  %681 = vmatpush2.msra.mxu0 0.0
  %682 = vmatprep.subr.mxu0 0.0
  %683 = vmatpush2.msra.mxu0 0.0
  %684 = vmatprep.subr.mxu0 0.0
  %685 = vmatpush2.msra.mxu0 0.0
  %686 = vmatprep.subr.mxu0 0.0
  %687 = vmatpush2.msra.mxu0 0.0
  %688 = vmatprep.subr.mxu0 0.0
  %689 = vmatpush2.msra.mxu0 0.0
  %690 = vmatprep.subr.mxu0 0.0
  %691 = vmatpush2.msra.mxu0 0.0
  %692 = vmatprep.subr.mxu0 0.0
  %693 = vmatpush2.msra.mxu0 0.0
  %694 = vmatprep.subr.mxu0 0.0
  %695 = vmatpush2.msra.mxu0 0.0
  %696 = vmatprep.subr.mxu0 0.0
  %697 = vmatpush2.msra.mxu0 0.0
  %698 = vmatprep.subr.mxu0 0.0
  %699 = vmatpush2.msra.mxu0 0.0
  %700 = vmatprep.subr.mxu0 0.0
  %701 = vmatpush2.msra.mxu0 0.0
  %702 = vmatprep.subr.mxu0 0.0
  %703 = vmatpush2.msra.mxu0 0.0
  %704 = vmatprep.subr.mxu0 0.0
  %705 = vmatpush2.msra.mxu0 0.0
  %706 = vmatprep.mubr.f32.mxu0 0.0
  %707 = vmatmul.mubr.f32.gmra.mxu0 %v542
  %v708 = vpop.f32.mrf.mxu0
  %v709 = vadd.f32 %v524, %v708
  %v710 = vpop.f32.mrf.mxu0
  %v711 = vadd.f32 %v524, %v710
  %712 = vmatprep.mubr.f32.mxu0 0.0
  %713 = vmatmul.mubr.f32.gmra.mxu0 %v545
  %v714 = vpop.f32.mrf.mxu0
  %v715 = vadd.f32 %v529, %v714
  %v716 = vpop.f32.mrf.mxu0
  %v717 = vadd.f32 %v529, %v716
  %718 = vmatprep.mubr.f32.mxu0 0.0
  %719 = vmatmul.mubr.f32.gmra.mxu0 %v548
  %v720 = vpop.f32.mrf.mxu0
  %v721 = vadd.f32 %v534, %v720
  %v722 = vpop.f32.mrf.mxu0
  %v723 = vadd.f32 %v534, %v722
  %724 = vmatprep.mubr.f32.mxu0 0.0
  %725 = vmatmul.mubr.f32.gmra.mxu0 %v551
  %v726 = vpop.f32.mrf.mxu0
  %v727 = vadd.f32 %v539, %v726
  %v728 = vpop.f32.mrf.mxu0
  %v729 = vadd.f32 %v539, %v728
  %730 = vdwg.mxu0
  %v731 = vmax.f32 %v620, 0.0
  %v732 = vmax.f32 %v622, 0.0
  %v733 = vmax.f32 %v709, 0.0
  %v734 = vmax.f32 %v711, 0.0
  %v735 = vmax.f32 %v626, 0.0
  %v736 = vmax.f32 %v628, 0.0
  %v737 = vmax.f32 %v715, 0.0
  %v738 = vmax.f32 %v717, 0.0
  %v739 = vmax.f32 %v632, 0.0
  %v740 = vmax.f32 %v634, 0.0
  %v741 = vmax.f32 %v721, 0.0
  %v742 = vmax.f32 %v723, 0.0
  %v743 = vmax.f32 %v638, 0.0
  %v744 = vmax.f32 %v640, 0.0
  %v745 = vmax.f32 %v727, 0.0
  %v746 = vmax.f32 %v729, 0.0
  %v747 = vld [vmem:[%s4] sm:$0xff]
  %v748 = vld [vmem:[%s5] sm:$0xff]
  %750 = vset.pattern.permute.xlu0 0
  %751 = vperm.xlu0 %750, %v748
  %v752 = vpop.permute.xlu0 %751
  %v755 = vsel %vm306, %v747, 0
  %757 = vmatprep.subr.mxu0 0.0
  %758 = vmatpush1.msra.mxu0 0.0
  %759 = vmatprep.subr.mxu0 0.0
  %760 = vmatpush1.msra.mxu0 0.0
  %761 = vmatprep.subr.mxu0 0.0
  %762 = vmatpush1.msra.mxu0 0.0
  %763 = vmatprep.subr.mxu0 0.0
  %764 = vmatpush1.msra.mxu0 0.0
  %765 = vmatprep.subr.mxu0 0.0
  %766 = vmatpush1.msra.mxu0 0.0
  %767 = vmatprep.subr.mxu0 0.0
  %768 = vmatpush1.msra.mxu0 0.0
  %769 = vmatprep.subr.mxu0 0.0
  %770 = vmatpush1.msra.mxu0 0.0
  %771 = vmatprep.subr.mxu0 0.0
  %772 = vmatpush1.msra.mxu0 0.0
  %773 = vmatprep.subr.mxu0 0.0
  %774 = vmatpush1.msra.mxu0 0.0
  %775 = vmatprep.subr.mxu0 0.0
  %776 = vmatpush1.msra.mxu0 0.0
  %777 = vmatprep.subr.mxu0 0.0
  %778 = vmatpush1.msra.mxu0 0.0
  %779 = vmatprep.subr.mxu0 0.0
  %780 = vmatpush1.msra.mxu0 0.0
  %781 = vmatprep.subr.mxu0 %v744
  %782 = vmatpush1.msra.mxu0 %v743
  %783 = vmatprep.subr.mxu0 %v740
  %784 = vmatpush1.msra.mxu0 %v739
  %785 = vmatprep.subr.mxu0 %v736
  %786 = vmatpush1.msra.mxu0 %v735
  %787 = vmatprep.subr.mxu0 %v732
  %788 = vmatpush1.msra.mxu0 %v731
  %789 = vmatprep.subr.mxu0 0.0
  %790 = vmatpush2.msra.mxu0 0.0
  %791 = vmatprep.subr.mxu0 0.0
  %792 = vmatpush2.msra.mxu0 0.0
  %793 = vmatprep.subr.mxu0 0.0
  %794 = vmatpush2.msra.mxu0 0.0
  %795 = vmatprep.subr.mxu0 0.0
  %796 = vmatpush2.msra.mxu0 0.0
  %797 = vmatprep.subr.mxu0 0.0
  %798 = vmatpush2.msra.mxu0 0.0
  %799 = vmatprep.subr.mxu0 0.0
  %800 = vmatpush2.msra.mxu0 0.0
  %801 = vmatprep.subr.mxu0 0.0
  %802 = vmatpush2.msra.mxu0 0.0
  %803 = vmatprep.subr.mxu0 0.0
  %804 = vmatpush2.msra.mxu0 0.0
  %805 = vmatprep.subr.mxu0 0.0
  %806 = vmatpush2.msra.mxu0 0.0
  %807 = vmatprep.subr.mxu0 0.0
  %808 = vmatpush2.msra.mxu0 0.0
  %809 = vmatprep.subr.mxu0 0.0
  %810 = vmatpush2.msra.mxu0 0.0
  %811 = vmatprep.subr.mxu0 0.0
  %812 = vmatpush2.msra.mxu0 0.0
  %813 = vmatprep.subr.mxu0 0.0
  %814 = vmatpush2.msra.mxu0 0.0
  %815 = vmatprep.subr.mxu0 0.0
  %816 = vmatpush2.msra.mxu0 0.0
  %817 = vmatprep.subr.mxu0 0.0
  %818 = vmatpush2.msra.mxu0 0.0
  %819 = vmatprep.subr.mxu0 0.0
  %820 = vmatpush2.msra.mxu0 0.0
  %821 = vmatprep.mubr.f32.mxu0 0.0
  %822 = vmatmul.mubr.f32.gmra.mxu0 %v755
  %v823 = vpop.f32.mrf.mxu0
  %v824 = vadd.f32 %v752, %v823
  %v825 = vpop.f32.mrf.mxu0
  %v826 = vadd.f32 %v752, %v825
  %827 = vdwg.mxu0
  %828 = vmatprep.subr.mxu0 0.0
  %829 = vmatpush1.msra.mxu0 0.0
  %830 = vmatprep.subr.mxu0 0.0
  %831 = vmatpush1.msra.mxu0 0.0
  %832 = vmatprep.subr.mxu0 0.0
  %833 = vmatpush1.msra.mxu0 0.0
  %834 = vmatprep.subr.mxu0 0.0
  %835 = vmatpush1.msra.mxu0 0.0
  %836 = vmatprep.subr.mxu0 0.0
  %837 = vmatpush1.msra.mxu0 0.0
  %838 = vmatprep.subr.mxu0 0.0
  %839 = vmatpush1.msra.mxu0 0.0
  %840 = vmatprep.subr.mxu0 0.0
  %841 = vmatpush1.msra.mxu0 0.0
  %842 = vmatprep.subr.mxu0 0.0
  %843 = vmatpush1.msra.mxu0 0.0
  %844 = vmatprep.subr.mxu0 0.0
  %845 = vmatpush1.msra.mxu0 0.0
  %846 = vmatprep.subr.mxu0 0.0
  %847 = vmatpush1.msra.mxu0 0.0
  %848 = vmatprep.subr.mxu0 0.0
  %849 = vmatpush1.msra.mxu0 0.0
  %850 = vmatprep.subr.mxu0 0.0
  %851 = vmatpush1.msra.mxu0 0.0
  %852 = vmatprep.subr.mxu0 %v746
  %853 = vmatpush1.msra.mxu0 %v745
  %854 = vmatprep.subr.mxu0 %v742
  %855 = vmatpush1.msra.mxu0 %v741
  %856 = vmatprep.subr.mxu0 %v738
  %857 = vmatpush1.msra.mxu0 %v737
  %858 = vmatprep.subr.mxu0 %v734
  %859 = vmatpush1.msra.mxu0 %v733
  %860 = vmatprep.subr.mxu0 0.0
  %861 = vmatpush2.msra.mxu0 0.0
  %862 = vmatprep.subr.mxu0 0.0
  %863 = vmatpush2.msra.mxu0 0.0
  %864 = vmatprep.subr.mxu0 0.0
  %865 = vmatpush2.msra.mxu0 0.0
  %866 = vmatprep.subr.mxu0 0.0
  %867 = vmatpush2.msra.mxu0 0.0
  %868 = vmatprep.subr.mxu0 0.0
  %869 = vmatpush2.msra.mxu0 0.0
  %870 = vmatprep.subr.mxu0 0.0
  %871 = vmatpush2.msra.mxu0 0.0
  %872 = vmatprep.subr.mxu0 0.0
  %873 = vmatpush2.msra.mxu0 0.0
  %874 = vmatprep.subr.mxu0 0.0
  %875 = vmatpush2.msra.mxu0 0.0
  %876 = vmatprep.subr.mxu0 0.0
  %877 = vmatpush2.msra.mxu0 0.0
  %878 = vmatprep.subr.mxu0 0.0
  %879 = vmatpush2.msra.mxu0 0.0
  %880 = vmatprep.subr.mxu0 0.0
  %881 = vmatpush2.msra.mxu0 0.0
  %882 = vmatprep.subr.mxu0 0.0
  %883 = vmatpush2.msra.mxu0 0.0
  %884 = vmatprep.subr.mxu0 0.0
  %885 = vmatpush2.msra.mxu0 0.0
  %886 = vmatprep.subr.mxu0 0.0
  %887 = vmatpush2.msra.mxu0 0.0
  %888 = vmatprep.subr.mxu0 0.0
  %889 = vmatpush2.msra.mxu0 0.0
  %890 = vmatprep.subr.mxu0 0.0
  %891 = vmatpush2.msra.mxu0 0.0
  %892 = vmatprep.mubr.f32.mxu0 0.0
  %893 = vmatmul.mubr.f32.gmra.mxu0 %v755
  %v894 = vpop.f32.mrf.mxu0
  %v895 = vadd.f32 %v752, %v894
  %v896 = vpop.f32.mrf.mxu0
  %v897 = vadd.f32 %v752, %v896
  %898 = vdwg.mxu0
  %v899 = vmax.f32 %v824, 0.0
  %v900 = vmax.f32 %v826, 0.0
  %v901 = vmax.f32 %v895, 0.0
  %v902 = vmax.f32 %v897, 0.0
  %903 = vst [vmem:[%s6] sm:$0xff] %v899
  %904 = vst [vmem:[%s6 + $0x8] sm:$0xff] %v900
  %s905 = scalar_lea.vmem %s6, 16
  %906 = vst [vmem:[%s905] sm:$0xff] %v901
  %907 = vst [vmem:[%s905 + $0x8] sm:$0xff] %v902
  // Predicated region
  $region26: #{conv_pppad_forward.1} parent=0 // pred_check
    _
  $region27: #{conv_pppad_forward.1} parent=0 // pred_check_branch
    %909 = sbr.rel (0) target = $region29
  $region28: #{conv_pppad_forward.1} parent=0 // pred_region
    _
  $region29: #{conv_pppad_forward.1} parent=0 // pred_fallthru
    _
  // Predicated region
  $region30: #{conv_pppad_forward.1} parent=0 // pred_check
    _
  $region31: #{conv_pppad_forward.1} parent=0 // pred_check_branch
    %911 = sbr.rel (0) target = $region33
  $region32: #{conv_pppad_forward.1} parent=0 // pred_region
    _
  $region33: #{conv_pppad_forward.1} parent=0 // pred_fallthru
    _

</llo_original>
